<compile_context>
chip_gen: v7x
topology: tpu7x:2x2x1
jax: 0.10.0
libtpu: 0.0.40
codegen_flags: <defaults>
</compile_context>

<pallas_src>
import jax
import jax.numpy as jnp
from jax.experimental import pallas as pl
from jax.experimental.pallas import tpu as pltpu

LANE = 128


def conv1x1_kernel(w_ref, b_ref, x_ref, o_ref):
    # w_ref: (C_out, C_in) f32 in SMEM
    # b_ref: (C_out,)      f32 in SMEM
    # x_ref: (1, C_in, t_hw)  VMEM tile (pixels on lane axis)
    # o_ref: (1, C_out, t_hw) VMEM tile (pixels on lane axis)
    c_out, c_in = w_ref.shape
    x = x_ref[0].astype(jnp.float32)  # (C_in, t_hw)

    rows = []
    for oc in range(c_out):
        acc = x[0:1, :] * w_ref[oc, 0]            # (1, t_hw) VPU mul
        for c in range(1, c_in):
            acc = acc + x[c:c + 1, :] * w_ref[oc, c]
        rows.append(acc + b_ref[oc])
    out = jnp.concatenate(rows, axis=0)           # (C_out, t_hw)
    o_ref[0] = out.astype(o_ref.dtype)


def outconv_forward(x_nchw, weight, bias, *, t_hw=8192):
    """Forward of outconv: y = Conv2d(in_ch, out_ch, kernel_size=1)(x).

    x_nchw: (N, C_in, H, W)
    weight: (C_out, C_in, 1, 1)
    bias:   (C_out,)
    returns (N, C_out, H, W)
    """
    N, C_in, H, W = x_nchw.shape
    C_out = weight.shape[0]
    HW = H * W

    # Pick a large, lane-aligned pixel tile; no divisibility constraint on HW.
    hw_lane = pl.cdiv(HW, LANE) * LANE
    t_hw = min(pl.cdiv(t_hw, LANE) * LANE, hw_lane)
    num_tiles = pl.cdiv(HW, t_hw)
    HW_pad = num_tiles * t_hw

    # Pure reshape (no data movement); zero-pad tail pixels if needed.
    x_flat = x_nchw.reshape(N, C_in, HW)
    if HW_pad != HW:
        x_flat = jnp.pad(x_flat, ((0, 0), (0, 0), (0, HW_pad - HW)))

    # Small parameters as 32-bit scalars for SMEM.
    w_mat = weight.reshape(C_out, C_in).astype(jnp.float32)
    b_vec = bias.reshape(C_out).astype(jnp.float32)

    out_flat = pl.pallas_call(
        conv1x1_kernel,
        out_shape=jax.ShapeDtypeStruct((N, C_out, HW_pad), x_nchw.dtype),
        grid=(N, num_tiles),
        in_specs=[
            pl.BlockSpec(memory_space=pltpu.MemorySpace.SMEM),   # weight
            pl.BlockSpec(memory_space=pltpu.MemorySpace.SMEM),   # bias
            pl.BlockSpec((1, C_in, t_hw), lambda n, j: (n, 0, j)),
        ],
        out_specs=pl.BlockSpec((1, C_out, t_hw), lambda n, j: (n, 0, j)),
        compiler_params=pltpu.CompilerParams(
            dimension_semantics=("parallel", "parallel"),
        ),
    )(w_mat, b_vec, x_flat)

    if HW_pad != HW:
        out_flat = out_flat[:, :, :HW]
    return out_flat.reshape(N, C_out, H, W)


if __name__ == "__main__":
    # Module config: outconv(in_ch=4, out_ch=3)
    N, C_in, H, W = 2, 4, 16, 16
    C_out = 3

    key = jax.random.PRNGKey(0)
    kx, kw, kb = jax.random.split(key, 3)

    x = jax.random.normal(kx, (N, C_in, H, W), dtype=jnp.float32)
    # Deterministic synthetic parameters matching nn.Conv2d(in_ch, out_ch, 1) shapes.
    weight = jax.random.normal(kw, (C_out, C_in, 1, 1), dtype=jnp.float32) * 0.1
    bias = jax.random.normal(kb, (C_out,), dtype=jnp.float32) * 0.1

    out = outconv_forward(x, weight, bias)
    out = jax.block_until_ready(out)

    # Sanity check against a plain-JAX reference of the same 1x1 conv.
    ref = (jnp.einsum("nchw,oc->nohw", x, weight.reshape(C_out, C_in))
           + bias[None, :, None, None])
    assert out.shape == (N, C_out, H, W)
    assert jnp.allclose(out, ref, atol=1e-5, rtol=1e-5)

    print("KERNEL_OK")
</pallas_src>

<mosaic_0001>
module attributes {stable_mosaic.version = 11 : i64} {
  func.func @conv1x1_kernel(%arg0: i32, %arg1: i32, %arg2: memref<3x4xf32, #tpu.memory_space<smem>>, %arg3: memref<3xf32, #tpu.memory_space<smem>>, %arg4: memref<1x4x256xf32, #tpu.memory_space<vmem>>, %arg5: memref<1x3x256xf32, #tpu.memory_space<vmem>>) attributes {dimension_semantics = [#tpu.dimension_semantics<parallel>, #tpu.dimension_semantics<parallel>], iteration_bounds = array<i64: 2, 1>, scalar_prefetch = 0 : i64, scratch_operands = 0 : i64, tpu.core_type = #tpu.core_type<tc>, window_params = [{transform_indices = @transform_0, window_bounds = array<i64: 3, 4>}, {transform_indices = @transform_1, window_bounds = array<i64: 3>}, {transform_indices = @transform_2, window_bounds = array<i64: 1, 4, 256>}, {transform_indices = @transform_3, window_bounds = array<i64: 1, 3, 256>}]} {
    %c0 = arith.constant 0 : index
    %c0_0 = arith.constant 0 : index
    %c0_1 = arith.constant 0 : index
    %0 = vector.load %arg4[%c0, %c0_0, %c0_1] : memref<1x4x256xf32, #tpu.memory_space<vmem>>, vector<1x4x256xf32>
    %1 = vector.shape_cast %0 : vector<1x4x256xf32> to vector<4x256xf32>
    %2 = vector.extract_strided_slice %1 {offsets = [0, 0], sizes = [1, 256], strides = [1, 1]} : vector<4x256xf32> to vector<1x256xf32>
    %c0_2 = arith.constant 0 : index
    %c0_3 = arith.constant 0 : index
    %3 = memref.load %arg2[%c0_2, %c0_3] : memref<3x4xf32, #tpu.memory_space<smem>>
    %4 = vector.broadcast %3 : f32 to vector<1x256xf32>
    %5 = arith.mulf %2, %4 : vector<1x256xf32>
    %6 = vector.extract_strided_slice %1 {offsets = [1, 0], sizes = [1, 256], strides = [1, 1]} : vector<4x256xf32> to vector<1x256xf32>
    %c0_4 = arith.constant 0 : index
    %c1 = arith.constant 1 : index
    %7 = memref.load %arg2[%c0_4, %c1] : memref<3x4xf32, #tpu.memory_space<smem>>
    %8 = vector.broadcast %7 : f32 to vector<1x256xf32>
    %9 = arith.mulf %6, %8 : vector<1x256xf32>
    %10 = arith.addf %5, %9 : vector<1x256xf32>
    %11 = vector.extract_strided_slice %1 {offsets = [2, 0], sizes = [1, 256], strides = [1, 1]} : vector<4x256xf32> to vector<1x256xf32>
    %c0_5 = arith.constant 0 : index
    %c2 = arith.constant 2 : index
    %12 = memref.load %arg2[%c0_5, %c2] : memref<3x4xf32, #tpu.memory_space<smem>>
    %13 = vector.broadcast %12 : f32 to vector<1x256xf32>
    %14 = arith.mulf %11, %13 : vector<1x256xf32>
    %15 = arith.addf %10, %14 : vector<1x256xf32>
    %16 = vector.extract_strided_slice %1 {offsets = [3, 0], sizes = [1, 256], strides = [1, 1]} : vector<4x256xf32> to vector<1x256xf32>
    %c0_6 = arith.constant 0 : index
    %c3 = arith.constant 3 : index
    %17 = memref.load %arg2[%c0_6, %c3] : memref<3x4xf32, #tpu.memory_space<smem>>
    %18 = vector.broadcast %17 : f32 to vector<1x256xf32>
    %19 = arith.mulf %16, %18 : vector<1x256xf32>
    %20 = arith.addf %15, %19 : vector<1x256xf32>
    %c0_7 = arith.constant 0 : index
    %21 = memref.load %arg3[%c0_7] : memref<3xf32, #tpu.memory_space<smem>>
    %22 = vector.broadcast %21 : f32 to vector<1x256xf32>
    %23 = arith.addf %20, %22 : vector<1x256xf32>
    %24 = vector.extract_strided_slice %1 {offsets = [0, 0], sizes = [1, 256], strides = [1, 1]} : vector<4x256xf32> to vector<1x256xf32>
    %c1_8 = arith.constant 1 : index
    %c0_9 = arith.constant 0 : index
    %25 = memref.load %arg2[%c1_8, %c0_9] : memref<3x4xf32, #tpu.memory_space<smem>>
    %26 = vector.broadcast %25 : f32 to vector<1x256xf32>
    %27 = arith.mulf %24, %26 : vector<1x256xf32>
    %28 = vector.extract_strided_slice %1 {offsets = [1, 0], sizes = [1, 256], strides = [1, 1]} : vector<4x256xf32> to vector<1x256xf32>
    %c1_10 = arith.constant 1 : index
    %c1_11 = arith.constant 1 : index
    %29 = memref.load %arg2[%c1_10, %c1_11] : memref<3x4xf32, #tpu.memory_space<smem>>
    %30 = vector.broadcast %29 : f32 to vector<1x256xf32>
    %31 = arith.mulf %28, %30 : vector<1x256xf32>
    %32 = arith.addf %27, %31 : vector<1x256xf32>
    %33 = vector.extract_strided_slice %1 {offsets = [2, 0], sizes = [1, 256], strides = [1, 1]} : vector<4x256xf32> to vector<1x256xf32>
    %c1_12 = arith.constant 1 : index
    %c2_13 = arith.constant 2 : index
    %34 = memref.load %arg2[%c1_12, %c2_13] : memref<3x4xf32, #tpu.memory_space<smem>>
    %35 = vector.broadcast %34 : f32 to vector<1x256xf32>
    %36 = arith.mulf %33, %35 : vector<1x256xf32>
    %37 = arith.addf %32, %36 : vector<1x256xf32>
    %38 = vector.extract_strided_slice %1 {offsets = [3, 0], sizes = [1, 256], strides = [1, 1]} : vector<4x256xf32> to vector<1x256xf32>
    %c1_14 = arith.constant 1 : index
    %c3_15 = arith.constant 3 : index
    %39 = memref.load %arg2[%c1_14, %c3_15] : memref<3x4xf32, #tpu.memory_space<smem>>
    %40 = vector.broadcast %39 : f32 to vector<1x256xf32>
    %41 = arith.mulf %38, %40 : vector<1x256xf32>
    %42 = arith.addf %37, %41 : vector<1x256xf32>
    %c1_16 = arith.constant 1 : index
    %43 = memref.load %arg3[%c1_16] : memref<3xf32, #tpu.memory_space<smem>>
    %44 = vector.broadcast %43 : f32 to vector<1x256xf32>
    %45 = arith.addf %42, %44 : vector<1x256xf32>
    %46 = vector.extract_strided_slice %1 {offsets = [0, 0], sizes = [1, 256], strides = [1, 1]} : vector<4x256xf32> to vector<1x256xf32>
    %c2_17 = arith.constant 2 : index
    %c0_18 = arith.constant 0 : index
    %47 = memref.load %arg2[%c2_17, %c0_18] : memref<3x4xf32, #tpu.memory_space<smem>>
    %48 = vector.broadcast %47 : f32 to vector<1x256xf32>
    %49 = arith.mulf %46, %48 : vector<1x256xf32>
    %50 = vector.extract_strided_slice %1 {offsets = [1, 0], sizes = [1, 256], strides = [1, 1]} : vector<4x256xf32> to vector<1x256xf32>
    %c2_19 = arith.constant 2 : index
    %c1_20 = arith.constant 1 : index
    %51 = memref.load %arg2[%c2_19, %c1_20] : memref<3x4xf32, #tpu.memory_space<smem>>
    %52 = vector.broadcast %51 : f32 to vector<1x256xf32>
    %53 = arith.mulf %50, %52 : vector<1x256xf32>
    %54 = arith.addf %49, %53 : vector<1x256xf32>
    %55 = vector.extract_strided_slice %1 {offsets = [2, 0], sizes = [1, 256], strides = [1, 1]} : vector<4x256xf32> to vector<1x256xf32>
    %c2_21 = arith.constant 2 : index
    %c2_22 = arith.constant 2 : index
    %56 = memref.load %arg2[%c2_21, %c2_22] : memref<3x4xf32, #tpu.memory_space<smem>>
    %57 = vector.broadcast %56 : f32 to vector<1x256xf32>
    %58 = arith.mulf %55, %57 : vector<1x256xf32>
    %59 = arith.addf %54, %58 : vector<1x256xf32>
    %60 = vector.extract_strided_slice %1 {offsets = [3, 0], sizes = [1, 256], strides = [1, 1]} : vector<4x256xf32> to vector<1x256xf32>
    %c2_23 = arith.constant 2 : index
    %c3_24 = arith.constant 3 : index
    %61 = memref.load %arg2[%c2_23, %c3_24] : memref<3x4xf32, #tpu.memory_space<smem>>
    %62 = vector.broadcast %61 : f32 to vector<1x256xf32>
    %63 = arith.mulf %60, %62 : vector<1x256xf32>
    %64 = arith.addf %59, %63 : vector<1x256xf32>
    %c2_25 = arith.constant 2 : index
    %65 = memref.load %arg3[%c2_25] : memref<3xf32, #tpu.memory_space<smem>>
    %66 = vector.broadcast %65 : f32 to vector<1x256xf32>
    %67 = arith.addf %64, %66 : vector<1x256xf32>
    %68 = tpu.concatenate %23, %45, %67 in 0 : vector<1x256xf32>, vector<1x256xf32>, vector<1x256xf32> -> vector<3x256xf32>
    %c0_26 = arith.constant 0 : index
    %c0_27 = arith.constant 0 : index
    %c0_28 = arith.constant 0 : index
    %69 = vector.load %arg5[%c0_26, %c0_27, %c0_28] : memref<1x3x256xf32, #tpu.memory_space<vmem>>, vector<1x3x256xf32>
    %70 = vector.shape_cast %69 : vector<1x3x256xf32> to vector<3x256xf32>
    %71 = vector.shape_cast %68 : vector<3x256xf32> to vector<1x3x256xf32>
    tpu.vector_store %arg5[%c0_26, %c0_27, %c0_28], %71 {strides = array<i32>} : memref<1x3x256xf32, #tpu.memory_space<vmem>>, vector<1x3x256xf32>,
    return
  }
  func.func @transform_0(%arg0: i32, %arg1: i32) -> (i32, i32) {
    %c0_i32 = arith.constant 0 : i32
    %c0_i32_0 = arith.constant 0 : i32
    %c0_i32_1 = arith.constant 0 : i32
    return %c0_i32, %c0_i32_0 : i32, i32
  }
  func.func @transform_1(%arg0: i32, %arg1: i32) -> i32 {
    %c0_i32 = arith.constant 0 : i32
    %c0_i32_0 = arith.constant 0 : i32
    return %c0_i32 : i32
  }
  func.func @transform_2(%arg0: i32, %arg1: i32) -> (i32, i32, i32) {
    %c0_i32 = arith.constant 0 : i32
    %c0_i32_0 = arith.constant 0 : i32
    return %arg0, %c0_i32, %arg1 : i32, i32, i32
  }
  func.func @transform_3(%arg0: i32, %arg1: i32) -> (i32, i32, i32) {
    %c0_i32 = arith.constant 0 : i32
    %c0_i32_0 = arith.constant 0 : i32
    return %arg0, %c0_i32, %arg1 : i32, i32, i32
  }
}

</mosaic_0001>

<llo_original>
// kernel: tpu_custom_call.1
$region0: #{tpu_custom_call.1}
  #allocation0 [shape = 'u32[]', space=smem, size = 0x4, offset = 0x4, fixed_abs, tag = 'smem constant byte address 0x4 - core index']
  #allocation1 [shape = 'u32[144,128]{1,0:T(1,128)}', space=vmem, size = 0x12000, scoped, tag = 'internal scratch']
  %s0 = inlined_call_operand.hbm [shape: f32[3,4], index: 0, kind: input, shape index: {}]
  %s1 = inlined_call_operand.vmem [shape: f32[3], index: 1, kind: input, shape index: {}]
  %s2 = inlined_call_operand.hbm [shape: f32[2,4,256], index: 2, kind: input, shape index: {}]
  %s3 = inlined_call_operand.vmem [shape: f32[2,3,256], index: 3, kind: output, shape index: {}]
  %s4 = sld [smem:[#allocation0]]
  $region57: #{tpu_custom_call.1} parent=0
    _
  %s6 = ssub.s32 1, %s4
  %s7 = scalar_select 0, %s6, %s4
  $region1: #{tpu_custom_call.1} parent=0
    #allocation2 [shape = 'u8[2048]{0}', space=smem, size = 0x800, scoped, tag = 'input window, operand 0, single buffered']
    #allocation3 [shape = 's32[2]{0}', space=sflag, size = 0x8, scoped, tag = 'scoped memory for tpu_custom_call.1']
    #allocation4 [shape = 's32[2]{0}', space=sflag, size = 0x8, scoped, tag = 'scoped memory for tpu_custom_call.1']
    #allocation5 [shape = 's32[2]{0}', space=sflag, size = 0x8, scoped, tag = 'scoped memory for tpu_custom_call.1']
    #allocation6 [shape = 'u8[512]{0}', space=smem, size = 0x200, scoped, tag = 'input window, operand 1, single buffered']
    #allocation7 [shape = 'u8[8192]{0}', space=vmem, size = 0x2000, scoped, tag = 'input window, operand 2']
    %8 = vsyncpa [#allocation4], 0
    %9 = vsyncpa [#allocation5], 0
    %10 = vsyncpa [#allocation3], 0
    %s11 = scalar_lea.sflag [#allocation3], 1
    %12 = vsyncpa %s11, 0
    loop: start=0, step=1, limit=4
    $region2: #{tpu_custom_call.1} parent=1 // loop_pre_header
      _
    $region3: #{tpu_custom_call.1} parent=1 // loop_header
      %s14 = sphi 0, %s18
      %p15 = scmp.ge.s32.totalorder %s14, 4
      %s21 = sphi 0, %s33
      %s22 = sphi 0, %s29
      %s23 = sphi 0, %s21
      %s24 = sphi 0, %s22
      %s25 = sphi 0, %s23
      %s26 = sphi 0, %s24
      %s34 = sphi 0, %s34
      %s36 = sphi 0, %s34
      %s37 = sphi 0, %s36
      %s51 = sphi 0, %s37
      %s55 = sphi 0, %s55
      %s57 = sphi 0, %s55
      %s58 = sphi 0, %s57
      %s72 = sphi 0, %s58
      %s80 = sphi 0, %s82
      %s83 = sphi 0, %s80
      %s84 = sphi 0, %s83
      %s100 = sphi 0, %s84
      %s108 = sphi 0, %s110
      %s111 = sphi 0, %s108
      %s112 = sphi 0, %s111
      %s128 = sphi 0, %s112
    $region4: #{tpu_custom_call.1} parent=1 // loop_header_branch
      %17 = sbr.rel (%p15) target = $region8
    $region5: #{tpu_custom_call.1} parent=1 // loop_body
      %s19 = ssub.s32 %s14, 1
      %s20 = ssub.s32 %s14, 2
      %s27 = sadd.s32 1, %s22
      %p28 = scmp.ge.s32.totalorder %s27, 1
      %s29 = scalar_select %p28, 0, %s27
      %s30 = sadd.s32 1, %s21
      %s31 = scalar_select %p28, %s30, %s21
      %p32 = scmp.ge.s32.totalorder %s31, 2
      %s33 = scalar_select %p32, 0, %s31
      %s35 = sadd.s32 %s34, 1
      %p38 = scmp.eq.s32.totalorder %s14, 1
      %p39 = scmp.ne.s32.totalorder %s34, %s36
      %p40 = scmp.eq.s32.totalorder %s14, 0
      %p41 = por %p39, %p40
      %p42 = scmp.ne.s32.totalorder %s34, %s36
      %p43 = scmp.eq.s32.totalorder %s19, 1
      %p44 = por %p42, %p43
      %p45 = scmp.ne.s32.totalorder %s36, %s37
      %p46 = scmp.eq.s32.totalorder %s19, 0
      %p47 = por %p45, %p46
      %p48 = scmp.ne.s32.totalorder %s36, %s37
      %p49 = scmp.eq.s32.totalorder %s20, 1
      %p50 = por %p48, %p49
      %p52 = scmp.ne.s32.totalorder %s37, %s51
      %p53 = scmp.eq.s32.totalorder %s20, 0
      %p54 = por %p52, %p53
      %s56 = sadd.s32 %s55, 1
      %p59 = scmp.eq.s32.totalorder %s14, 1
      %p60 = scmp.ne.s32.totalorder %s55, %s57
      %p61 = scmp.eq.s32.totalorder %s14, 0
      %p62 = por %p60, %p61
      %p63 = scmp.ne.s32.totalorder %s55, %s57
      %p64 = scmp.eq.s32.totalorder %s19, 1
      %p65 = por %p63, %p64
      %p66 = scmp.ne.s32.totalorder %s57, %s58
      %p67 = scmp.eq.s32.totalorder %s19, 0
      %p68 = por %p66, %p67
      %p69 = scmp.ne.s32.totalorder %s57, %s58
      %p70 = scmp.eq.s32.totalorder %s20, 1
      %p71 = por %p69, %p70
      %p73 = scmp.ne.s32.totalorder %s58, %s72
      %p74 = scmp.eq.s32.totalorder %s20, 0
      %p75 = por %p73, %p74
      %s76 = ssub.s32 %s21, %s33
      %s77 = ssub.s32 %s22, %s29
      %s78 = sor.u32 %s76, %s77
      %p79 = scmp.eq.s32.totalorder %s78, 0
      %s81 = sadd.s32 %s80, 1
      %s82 = scalar_select %p79, %s80, %s81
      %p85 = pneg %p79
      %p86 = scmp.eq.s32.totalorder %s14, 1
      %p87 = por %p85, %p86
      %p88 = scmp.ne.s32.totalorder %s80, %s83
      %p89 = scmp.eq.s32.totalorder %s14, 0
      %p90 = por %p88, %p89
      %p91 = scmp.ne.s32.totalorder %s80, %s83
      %p92 = scmp.eq.s32.totalorder %s19, 1
      %p93 = por %p91, %p92
      %p94 = scmp.ne.s32.totalorder %s83, %s84
      %p95 = scmp.eq.s32.totalorder %s19, 0
      %p96 = por %p94, %p95
      %p97 = scmp.ne.s32.totalorder %s83, %s84
      %p98 = scmp.eq.s32.totalorder %s20, 1
      %p99 = por %p97, %p98
      %p101 = scmp.ne.s32.totalorder %s84, %s100
      %p102 = scmp.eq.s32.totalorder %s20, 0
      %p103 = por %p101, %p102
      %s104 = ssub.s32 %s21, %s33
      %s105 = ssub.s32 %s22, %s29
      %s106 = sor.u32 %s104, %s105
      %p107 = scmp.eq.s32.totalorder %s106, 0
      %s109 = sadd.s32 %s108, 1
      %s110 = scalar_select %p107, %s108, %s109
      %p113 = pneg %p107
      %p114 = scmp.eq.s32.totalorder %s14, 1
      %p115 = por %p113, %p114
      %p116 = scmp.ne.s32.totalorder %s108, %s111
      %p117 = scmp.eq.s32.totalorder %s14, 0
      %p118 = por %p116, %p117
      %p119 = scmp.ne.s32.totalorder %s108, %s111
      %p120 = scmp.eq.s32.totalorder %s19, 1
      %p121 = por %p119, %p120
      %p122 = scmp.ne.s32.totalorder %s111, %s112
      %p123 = scmp.eq.s32.totalorder %s19, 0
      %p124 = por %p122, %p123
      %p125 = scmp.ne.s32.totalorder %s111, %s112
      %p126 = scmp.eq.s32.totalorder %s20, 1
      %p127 = por %p125, %p126
      %p129 = scmp.ne.s32.totalorder %s112, %s128
      %p130 = scmp.eq.s32.totalorder %s20, 0
      %p131 = por %p129, %p130
      %p132 = scmp.le.s32.totalorder 1, %s14
      %p133 = scmp.lt.s32.totalorder %s14, 3
      %p134 = pnand %p132, %p133
      %p135 = pneg %p134
      // Predicated region
      $region9: #{tpu_custom_call.1} parent=5 // pred_check
        _
      $region10: #{tpu_custom_call.1} parent=5 // pred_check_branch
        %137 = sbr.rel (%p134) target = $region12
      $region11: #{tpu_custom_call.1} parent=5 // pred_region
        %s138 = ssub.s32 %s14, 1
        // Predicated region
        $region13: #{tpu_custom_call.1} parent=11 // pred_check
          %p139 = pneg %p47
        $region14: #{tpu_custom_call.1} parent=11 // pred_check_branch
          %141 = sbr.rel (%p139) target = $region16
        $region15: #{tpu_custom_call.1} parent=11 // pred_region
          %s143 = ssub.s32 64, 64
          %144 = vsyncadd [#allocation4], %s143
          %147 = dma.hbm_to_smem %s0, 64, [#allocation2], [#allocation4]
        $region16: #{tpu_custom_call.1} parent=11 // pred_fallthru
          _
        // Predicated region
        $region17: #{tpu_custom_call.1} parent=11 // pred_check
          %p148 = pneg %p68
        $region18: #{tpu_custom_call.1} parent=11 // pred_check_branch
          %150 = sbr.rel (%p148) target = $region20
        $region19: #{tpu_custom_call.1} parent=11 // pred_region
          %s152 = ssub.s32 16, 16
          %153 = vsyncadd [#allocation5], %s152
          %s155 = sshll.u32 %s1, 4
          %s156 = int_to_ptr.vmem [resolvable:$true] %s155
          %158 = dma.vmem_to_smem %s156, 16, [#allocation6], [#allocation5]
        $region20: #{tpu_custom_call.1} parent=11 // pred_fallthru
          _
      $region12: #{tpu_custom_call.1} parent=5 // pred_fallthru
        _
      %p159 = scmp.lt.s32.totalorder %s14, 2
      // Predicated region
      $region21: #{tpu_custom_call.1} parent=5 // pred_check
        %p160 = pneg %p159
      $region22: #{tpu_custom_call.1} parent=5 // pred_check_branch
        %162 = sbr.rel (%p160) target = $region24
      $region23: #{tpu_custom_call.1} parent=5 // pred_region
        // Predicated region
        $region25: #{tpu_custom_call.1} parent=23 // pred_check
          %p163 = pneg %p90
        $region26: #{tpu_custom_call.1} parent=23 // pred_check_branch
          %165 = sbr.rel (%p163) target = $region28
        $region27: #{tpu_custom_call.1} parent=23 // pred_region
          %s166 = sand.u32 %s80, 1
          %s167 = scalar_lea.sflag [#allocation3], %s166
          %s168 = sand.u32 %s80, 1
          %s169 = smul.addr %s168, 8
          %s170 = scalar_lea.vmem [#allocation7], %s169
          %s171 = smul.u32 2, %s22
          %s173 = ssub.s32 128, 128
          %174 = vsyncadd %s167, %s173
          %s175 = smul.addr %s21, 2
          %s176 = sadd.s32 %s171, %s175
          %s177 = smul.addr %s176, 64
          %s178 = scalar_lea.hbm %s2, %s177
          %s180 = sshll.u32 %s170, 4
          %s181 = int_to_ptr.vmem [resolvable:$true] %s180
          %183 = dma.hbm_to_vmem [thread:$0]  %s178, 128, %s181, %s167
        $region28: #{tpu_custom_call.1} parent=23 // pred_fallthru
          _
      $region24: #{tpu_custom_call.1} parent=5 // pred_fallthru
        _
      %p184 = scmp.le.s32.totalorder 1, %s14
      %p185 = scmp.lt.s32.totalorder %s14, 3
      %p186 = pnand %p184, %p185
      %p187 = pneg %p186
      // Predicated region
      $region29: #{tpu_custom_call.1} parent=5 // pred_check
        _
      $region30: #{tpu_custom_call.1} parent=5 // pred_check_branch
        %189 = sbr.rel (%p186) target = $region32
      $region31: #{tpu_custom_call.1} parent=5 // pred_region
        %s190 = ssub.s32 %s14, 1
        // Predicated region
        $region33: #{tpu_custom_call.1} parent=31 // pred_check
          %p191 = pneg %p47
        $region34: #{tpu_custom_call.1} parent=31 // pred_check_branch
          %193 = sbr.rel (%p191) target = $region36
        $region35: #{tpu_custom_call.1} parent=31 // pred_region
          %194 = dma.done [#allocation4], 64
        $region36: #{tpu_custom_call.1} parent=31 // pred_fallthru
          _
        // Predicated region
        $region37: #{tpu_custom_call.1} parent=31 // pred_check
          %p195 = pneg %p68
        $region38: #{tpu_custom_call.1} parent=31 // pred_check_branch
          %197 = sbr.rel (%p195) target = $region40
        $region39: #{tpu_custom_call.1} parent=31 // pred_region
          %198 = dma.done [#allocation5], 16
        $region40: #{tpu_custom_call.1} parent=31 // pred_fallthru
          _
        %s199 = sand.u32 %s83, 1
        %s200 = scalar_lea.sflag [#allocation3], %s199
        %s201 = sand.u32 %s83, 1
        %s202 = smul.addr %s201, 8
        %s203 = scalar_lea.vmem [#allocation7], %s202
        // Predicated region
        $region41: #{tpu_custom_call.1} parent=31 // pred_check
          %p204 = pneg %p96
        $region42: #{tpu_custom_call.1} parent=31 // pred_check_branch
          %206 = sbr.rel (%p204) target = $region44
        $region43: #{tpu_custom_call.1} parent=31 // pred_region
          %207 = dma.done %s200, 128
        $region44: #{tpu_custom_call.1} parent=31 // pred_fallthru
          _
        %208 = sfence
        %p209 = pneg %p47
        %p210 = pneg %p44
        %p211 = pneg %p68
        %p212 = pneg %p65
        %s213 = sand.u32 %s83, 1
        %s214 = scalar_lea.sflag [#allocation3], %s213
        %s215 = sand.u32 %s83, 1
        %s216 = smul.addr %s215, 8
        %s217 = scalar_lea.vmem [#allocation7], %s216
        %p218 = pneg %p96
        %p219 = pneg %p93
        %p220 = pneg %p124
        %p221 = pneg %p121
        %s222 = smul.u32 2, %s24
        %p223 = scmp.lt.s32.totalorder %s23, 1
        %s224 = scalar_select %p223, %s23, 1
        %p225 = scmp.lt.s32.totalorder %s222, 1
        %s226 = scalar_select %p225, %s222, 1
        %s227 = smul.addr %s224, 2
        %s228 = sadd.s32 %s226, %s227
        %s229 = smul.addr %s228, 4
        %s230 = scalar_lea.vmem %s3, %s229
        %s231 = smul.u32 2, %s24
        %s232 = smul.u32 2, %s24
        %p233 = scmp.lt.s32.totalorder %s23, 1
        %s234 = scalar_select %p233, %s23, 1
        %p235 = scmp.lt.s32.totalorder %s232, 1
        %s236 = scalar_select %p235, %s232, 1
        %s237 = smul.addr %s234, 2
        %s238 = sadd.s32 %s236, %s237
        %s239 = smul.addr %s238, 4
        %s240 = scalar_lea.vmem %s3, %s239
        %s241 = smul.u32 2, %s24
        %v242 = vld [vmem:[%s203] sm:$0xff]
        %s243 = sld [smem:[#allocation2]]
        %v244 = vstv %s243
        %v245 = vmul.f32 %v242, %v244
        %s246 = sld [smem:[#allocation2 + $0x1]]
        %v247 = vstv %s246
        %v248 = vmul.f32 %v242, %v247
        %v250 = vrot.slane %v248, 5
        %v251 = vrot.slane %v250, 4
        %v253 = vadd.f32 %v245, %v251
        %s254 = sld [smem:[#allocation2 + $0x2]]
        %v255 = vstv %s254
        %v256 = vmul.f32 %v242, %v255
        %v258 = vrot.slane %v256, 6
        %v259 = vrot.slane %v258, 4
        %v261 = vadd.f32 %v253, %v259
        %s262 = sld [smem:[#allocation2 + $0x3]]
        %v263 = vstv %s262
        %v264 = vmul.f32 %v242, %v263
        %v266 = vrot.slane %v264, 7
        %v267 = vrot.slane %v266, 4
        %v269 = vadd.f32 %v261, %v267
        %s270 = sld [smem:[#allocation6]]
        %v271 = vstv %s270
        %v272 = vadd.f32 %v269, %v271
        %s273 = sld [smem:[#allocation2 + $0x80]]
        %v274 = vstv %s273
        %v275 = vmul.f32 %v242, %v274
        %s276 = sld [smem:[#allocation2 + $0x81]]
        %v277 = vstv %s276
        %v278 = vmul.f32 %v242, %v277
        %v280 = vrot.slane %v278, 5
        %v281 = vrot.slane %v280, 4
        %v283 = vadd.f32 %v275, %v281
        %s284 = sld [smem:[#allocation2 + $0x82]]
        %v285 = vstv %s284
        %v286 = vmul.f32 %v242, %v285
        %v288 = vrot.slane %v286, 6
        %v289 = vrot.slane %v288, 4
        %v291 = vadd.f32 %v283, %v289
        %s292 = sld [smem:[#allocation2 + $0x83]]
        %v293 = vstv %s292
        %v294 = vmul.f32 %v242, %v293
        %v296 = vrot.slane %v294, 7
        %v297 = vrot.slane %v296, 4
        %v299 = vadd.f32 %v291, %v297
        %s300 = sld [smem:[#allocation6 + $0x1]]
        %v301 = vstv %s300
        %v302 = vadd.f32 %v299, %v301
        %s303 = sld [smem:[#allocation2 + $0x100]]
        %v304 = vstv %s303
        %v305 = vmul.f32 %v242, %v304
        %s306 = sld [smem:[#allocation2 + $0x101]]
        %v307 = vstv %s306
        %v308 = vmul.f32 %v242, %v307
        %v310 = vrot.slane %v308, 5
        %v311 = vrot.slane %v310, 4
        %v313 = vadd.f32 %v305, %v311
        %s314 = sld [smem:[#allocation2 + $0x102]]
        %v315 = vstv %s314
        %v316 = vmul.f32 %v242, %v315
        %v318 = vrot.slane %v316, 6
        %v319 = vrot.slane %v318, 4
        %v321 = vadd.f32 %v313, %v319
        %s322 = sld [smem:[#allocation2 + $0x103]]
        %v323 = vstv %s322
        %v324 = vmul.f32 %v242, %v323
        %v326 = vrot.slane %v324, 7
        %v327 = vrot.slane %v326, 4
        %v329 = vadd.f32 %v321, %v327
        %s330 = sld [smem:[#allocation6 + $0x2]]
        %v331 = vstv %s330
        %v332 = vadd.f32 %v329, %v331
        %v334 = vlaneseq
        %v335 = vshrl.u32 %v334, 7
        %v336 = vsub.s32 0, %v335
        %v337 = vrot.slane %v272, %v336
        %v338 = vlaneseq
        %v339 = vshrl.u32 %v338, 7
        %v340 = vsub.s32 4, %v339
        %v341 = vrot.slane %v272, %v340
        %v345 = vlaneseq
        %v346 = vshrl.u32 %v345, 7
        %v347 = vsub.s32 0, %v346
        %v348 = vrot.slane %v302, %v347
        %v349 = vlaneseq
        %v350 = vshrl.u32 %v349, 7
        %v351 = vsub.s32 4, %v350
        %v352 = vrot.slane %v302, %v351
        %v356 = vlaneseq
        %v357 = vshrl.u32 %v356, 7
        %v358 = vsub.s32 0, %v357
        %v359 = vrot.slane %v332, %v358
        %v360 = vlaneseq
        %v361 = vshrl.u32 %v360, 7
        %v362 = vsub.s32 4, %v361
        %v363 = vrot.slane %v332, %v362
        %vm366 = vcmask 1040384
        %v367 = vsel %vm366, %v337, %v348
        %v368 = vsel %vm366, %v341, %v352
        %vm369 = vcmask 1041408
        %v370 = vsel %vm369, %v367, %v359
        %v371 = vsel %vm369, %v368, %v363
        %v374 = vcombine.low %v370, %v371
        %376 = vst [vmem:[%s240] sm:$0x77] %v374
        %s377 = smul.u32 2, %s24
        %p378 = scmp.lt.s32.totalorder %s23, 1
        %s379 = scalar_select %p378, %s23, 1
        %p380 = scmp.lt.s32.totalorder %s377, 1
        %s381 = scalar_select %p380, %s377, 1
        %s382 = smul.addr %s379, 2
        %s383 = sadd.s32 %s381, %s382
        %s384 = smul.addr %s383, 4
        %s385 = scalar_lea.vmem %s3, %s384
        // Predicated region
        $region45: #{tpu_custom_call.1} parent=31 // pred_check
          %p386 = pneg %p121
        $region46: #{tpu_custom_call.1} parent=31 // pred_check_branch
          %388 = sbr.rel (%p386) target = $region48
        $region47: #{tpu_custom_call.1} parent=31 // pred_region
          %s389 = smul.u32 2, %s24
        $region48: #{tpu_custom_call.1} parent=31 // pred_fallthru
          _
      $region32: #{tpu_custom_call.1} parent=5 // pred_fallthru
        _
      %p390 = scmp.le.s32.totalorder 2, %s14
      // Predicated region
      $region49: #{tpu_custom_call.1} parent=5 // pred_check
        %p391 = pneg %p390
      $region50: #{tpu_custom_call.1} parent=5 // pred_check_branch
        %393 = sbr.rel (%p391) target = $region52
      $region51: #{tpu_custom_call.1} parent=5 // pred_region
        %s394 = ssub.s32 %s14, 2
        // Predicated region
        $region53: #{tpu_custom_call.1} parent=51 // pred_check
          %p395 = pneg %p127
        $region54: #{tpu_custom_call.1} parent=51 // pred_check_branch
          %397 = sbr.rel (%p395) target = $region56
        $region55: #{tpu_custom_call.1} parent=51 // pred_region
          %s398 = smul.u32 2, %s26
          %p399 = scmp.lt.s32.totalorder %s25, 1
          %s400 = scalar_select %p399, %s25, 1
          %p401 = scmp.lt.s32.totalorder %s398, 1
          %s402 = scalar_select %p401, %s398, 1
          %s403 = smul.addr %s400, 2
          %s404 = sadd.s32 %s402, %s403
          %s405 = smul.addr %s404, 4
          %s406 = scalar_lea.vmem %s3, %s405
        $region56: #{tpu_custom_call.1} parent=51 // pred_fallthru
          _
      $region52: #{tpu_custom_call.1} parent=5 // pred_fallthru
        _
    $region6: #{tpu_custom_call.1} parent=1 // loop_footer
      %s18 = sadd.s32 1, %s14
    $region7: #{tpu_custom_call.1} parent=1 // loop_footer_branch
      %13 = sbr.rel target = $region3
    $region8: #{tpu_custom_call.1} parent=1 // loop_exit
      _
    %407 = vsyncpa [#allocation3], 1
    %s408 = scalar_lea.sflag [#allocation3], 1
    %409 = vsyncpa %s408, 1
    %410 = vsyncpa [#allocation4], 1
    %s411 = scalar_lea.sflag [#allocation4], 1
    %412 = vsyncpa %s411, 1
    %413 = vsyncpa [#allocation5], 1
    %s414 = scalar_lea.sflag [#allocation5], 1
    %415 = vsyncpa %s414, 1

</llo_original>
